<compile_context>
chip_gen: v7x
topology: tpu7x:2x2x1
jax: 0.10.0
libtpu: 0.0.40
codegen_flags: <defaults>
</compile_context>

<pallas_src>
import functools

import jax
import jax.numpy as jnp
from jax.experimental import pallas as pl
from jax.experimental.pallas import tpu as pltpu


def _round_up(x, m):
    return (x + m - 1) // m * m


def _activation(x, kind):
    if kind == "sigmoid":
        return jax.nn.sigmoid(x)
    elif kind == "relu":
        return jnp.maximum(x, 0.0)
    else:  # tanh (PyTorch default branch)
        return jnp.tanh(x)


def decoder_kernel(z_ref, w1_ref, w2_ref, w3_ref, w4_ref, bpack_ref, o_ref,
                   *, activation, h1p, h2p, dp, split):
    # Packed biases: one VMEM tile, sliced statically (all offsets 128-aligned).
    bp = bpack_ref[...]                   # f32 (4, Fmax)
    b1 = bp[0:1, 0:h1p]
    b2 = bp[1:2, 0:h2p]
    b3 = bp[2:3, 0:h2p]
    b4 = bp[3:4, 0:dp]
    cdt = w1_ref.dtype                    # MXU operand dtype (bf16 or f32)

    def chain(x):
        # y = x @ W + b per layer; MXU in `cdt`, accumulation + VPU/EUP in f32.
        h = jnp.dot(x.astype(cdt), w1_ref[...], preferred_element_type=jnp.float32)
        h = _activation(h + b1, activation)                 # latent -> hidden//2
        h = jnp.dot(h.astype(cdt), w2_ref[...], preferred_element_type=jnp.float32)
        h = _activation(h + b2, activation)                 # hidden//2 -> hidden
        h = jnp.dot(h.astype(cdt), w3_ref[...], preferred_element_type=jnp.float32)
        h = _activation(h + b3, activation)                 # hidden -> hidden
        h = jnp.dot(h.astype(cdt), w4_ref[...], preferred_element_type=jnp.float32)
        return jnp.maximum(h + b4, 0.0)                     # hidden -> input, ReLU

    tb = z_ref.shape[0]
    if split:
        # Two independent sub-chains -> the scheduler can overlap MXU pushes of
        # one half with VALU/EUP activation work of the other half.
        half = tb // 2
        o_ref[0:half, :] = chain(z_ref[0:half, :]).astype(o_ref.dtype)
        o_ref[half:tb, :] = chain(z_ref[half:tb, :]).astype(o_ref.dtype)
    else:
        o_ref[...] = chain(z_ref[...]).astype(o_ref.dtype)


def prepare_decoder_params(params, compute_dtype=jnp.bfloat16):
    """One-time padding + cast of the decoder weights (hoisted out of forward).

    Feature dims are zero-padded up to multiples of 128 (lane-dense); padded
    rows of w2/w3/w4 are zero (see correctness note at top of file).
    """
    w1, b1, w2, b2, w3, b3, w4, b4 = params
    L, H1 = w1.shape                      # latent_dim, hidden_dim // 2
    H2 = w2.shape[1]                      # hidden_dim
    D = w4.shape[1]                       # input_dim
    H1p, H2p, Dp = (_round_up(d, 128) for d in (H1, H2, D))
    Fmax = max(H1p, H2p, Dp)

    cdt = compute_dtype
    w1p = jnp.zeros((L, H1p), cdt).at[:, :H1].set(w1.astype(cdt))
    w2p = jnp.zeros((H1p, H2p), cdt).at[:H1, :H2].set(w2.astype(cdt))
    w3p = jnp.zeros((H2p, H2p), cdt).at[:H2, :H2].set(w3.astype(cdt))
    w4p = jnp.zeros((H2p, Dp), cdt).at[:H2, :D].set(w4.astype(cdt))

    bpack = jnp.zeros((4, Fmax), jnp.float32)
    bpack = bpack.at[0, :H1].set(b1.reshape(-1).astype(jnp.float32))
    bpack = bpack.at[1, :H2].set(b2.reshape(-1).astype(jnp.float32))
    bpack = bpack.at[2, :H2].set(b3.reshape(-1).astype(jnp.float32))
    bpack = bpack.at[3, :D].set(b4.reshape(-1).astype(jnp.float32))

    dims = dict(L=L, H1=H1, H2=H2, D=D, H1p=H1p, H2p=H2p, Dp=Dp, Fmax=Fmax)
    return dict(w1=w1p, w2=w2p, w3=w3p, w4=w4p, bpack=bpack, dims=dims)


def decoder_forward(z, prepared, activation="relu"):
    """Fused MLP decoder. z: [B, latent_dim]; `prepared` from prepare_decoder_params."""
    w1p, w2p, w3p, w4p, bpack = (prepared[k] for k in ("w1", "w2", "w3", "w4", "bpack"))
    d = prepared["dims"]
    L, D = d["L"], d["D"]
    H1p, H2p, Dp, Fmax = d["H1p"], d["H2p"], d["Dp"], d["Fmax"]
    B = z.shape[0]
    assert z.shape[1] == L

    # Batch tile: fill the 256-wide MXU on v6e/v7x, keep >=2 grid steps for
    # v7x megacore whenever B >= 16, and stay 8-row (sublane) aligned.
    TB = min(256, max(8, _round_up(-(-B // 2), 8)))
    Bp = _round_up(B, TB)
    zp = z.astype(jnp.float32)
    if Bp != B:
        zp = jnp.pad(zp, ((0, Bp - B), (0, 0)))

    split = (TB % 16 == 0)
    kernel = functools.partial(decoder_kernel, activation=activation,
                               h1p=H1p, h2p=H2p, dp=Dp, split=split)

    wsize = jnp.dtype(w1p.dtype).itemsize
    weight_elems = L * H1p + H1p * H2p + H2p * H2p + H2p * Dp
    cost = pl.CostEstimate(
        flops=2 * Bp * weight_elems,
        transcendentals=(Bp * (H1p + 2 * H2p)
                         if activation in ("sigmoid", "tanh") else 0),
        bytes_accessed=(4 * Bp * (L + Dp) + wsize * weight_elems + 4 * 4 * Fmax),
    )

    # Explicit scoped-VMEM budget: worst case (double-buffered fallback) weights
    # + pipelined z/out blocks + activation headroom, clamped to [32, 128] MiB.
    need = int(1.25 * (2 * wsize * weight_elems + 2 * 4 * 4 * Fmax
                       + 2 * 4 * TB * (L + Dp)
                       + 2 * 4 * TB * (H1p + H2p + Dp)))
    vmem_limit = min(128 << 20, max(32 << 20, need))

    def run(single_buffer_weights):
        const2d = lambda i: (0, 0)   # weights / biases resident across grid steps

        def wspec(shape):
            if single_buffer_weights:
                return pl.BlockSpec(shape, const2d, pipeline_mode=pl.Buffered(1))
            return pl.BlockSpec(shape, const2d)

        return pl.pallas_call(
            kernel,
            out_shape=jax.ShapeDtypeStruct((Bp, Dp), jnp.float32),
            grid_spec=pl.GridSpec(
                grid=(Bp // TB,),
                in_specs=[
                    pl.BlockSpec((TB, L), lambda i: (i, 0)),   # z: streamed per step
                    wspec((L, H1p)),
                    wspec((H1p, H2p)),
                    wspec((H2p, H2p)),
                    wspec((H2p, Dp)),
                    wspec((4, Fmax)),                          # packed biases
                ],
                out_specs=pl.BlockSpec((TB, Dp), lambda i: (i, 0)),
            ),
            compiler_params=pltpu.CompilerParams(
                dimension_semantics=("parallel",),
                vmem_limit_bytes=vmem_limit),
            cost_estimate=cost,
        )(zp, w1p, w2p, w3p, w4p, bpack)

    try:
        out_p = run(single_buffer_weights=True)
    except Exception:
        # Fallback for builds that reject single-buffered pipeline_mode.
        out_p = run(single_buffer_weights=False)

    return out_p[:B, :D]


def init_decoder_params(key, input_dim, hidden_dim, latent_dim):
    """Deterministic init mimicking PyTorch Linear's U(-1/sqrt(fan_in), +)."""
    dims = [(latent_dim, hidden_dim // 2),
            (hidden_dim // 2, hidden_dim),
            (hidden_dim, hidden_dim),
            (hidden_dim, input_dim)]
    params = []
    for (fan_in, fan_out) in dims:
        key, kw, kb = jax.random.split(key, 3)
        bound = 1.0 / jnp.sqrt(fan_in)
        # stored as (in, out) — transposed vs PyTorch's (out, in)
        w = jax.random.uniform(kw, (fan_in, fan_out), jnp.float32, -bound, bound)
        b = jax.random.uniform(kb, (1, fan_out), jnp.float32, -bound, bound)
        params += [w, b]
    return tuple(params)


def decoder_reference(z, params, activation="relu"):
    """Pure-JAX f32 reference for correctness checking."""
    w1, b1, w2, b2, w3, b3, w4, b4 = params
    h = _activation(z @ w1 + b1, activation)
    h = _activation(h @ w2 + b2, activation)
    h = _activation(h @ w3 + b3, activation)
    return jnp.maximum(h @ w4 + b4, 0.0)


if __name__ == "__main__":
    # small shapes consistent with the module
    batch, input_dim, hidden_dim, latent_dim = 8, 64, 32, 8

    key = jax.random.PRNGKey(0)
    key, kz = jax.random.split(key)
    z = jax.random.normal(kz, (batch, latent_dim), jnp.float32)
    params = init_decoder_params(key, input_dim, hidden_dim, latent_dim)

    # Padding / casting is done ONCE here (hoisted out of the per-call path).
    prepared = {
        "float32": prepare_decoder_params(params, jnp.float32),
        "bfloat16": prepare_decoder_params(params, jnp.bfloat16),
    }
    tols = {"float32": 1e-5, "bfloat16": 5e-2}   # bf16 MXU, f32 accumulation

    for activation in ("relu", "tanh", "sigmoid"):
        ref = decoder_reference(z, params, activation)
        for name, prep in prepared.items():
            out = jax.block_until_ready(decoder_forward(z, prep, activation))
            assert out.shape == (batch, input_dim)
            tol = tols[name]
            assert jnp.allclose(out, ref, atol=tol, rtol=tol), \
                f"mismatch vs reference for activation={activation}, dtype={name}"

    print("KERNEL_OK")
</pallas_src>

<mosaic_0001>
module attributes {stable_mosaic.version = 11 : i64} {
  func.func @decoder_kernel(%arg0: i32, %arg1: memref<8x8xf32, #tpu.memory_space<vmem>>, %arg2: memref<8x128xf32, #tpu.memory_space<vmem>>, %arg3: memref<128x128xf32, #tpu.memory_space<vmem>>, %arg4: memref<128x128xf32, #tpu.memory_space<vmem>>, %arg5: memref<128x128xf32, #tpu.memory_space<vmem>>, %arg6: memref<4x128xf32, #tpu.memory_space<vmem>>, %arg7: memref<8x128xf32, #tpu.memory_space<vmem>>) attributes {dimension_semantics = [#tpu.dimension_semantics<parallel>], iteration_bounds = array<i64: 1>, scalar_prefetch = 0 : i64, scratch_operands = 0 : i64, tpu.core_type = #tpu.core_type<tc>, window_params = [{transform_indices = @transform_0, window_bounds = array<i64: 8, 8>}, {pipeline_mode = #tpu.pipeline_mode<synchronous>, transform_indices = @transform_1, window_bounds = array<i64: 8, 128>}, {pipeline_mode = #tpu.pipeline_mode<synchronous>, transform_indices = @transform_2, window_bounds = array<i64: 128, 128>}, {pipeline_mode = #tpu.pipeline_mode<synchronous>, transform_indices = @transform_3, window_bounds = array<i64: 128, 128>}, {pipeline_mode = #tpu.pipeline_mode<synchronous>, transform_indices = @transform_4, window_bounds = array<i64: 128, 128>}, {pipeline_mode = #tpu.pipeline_mode<synchronous>, transform_indices = @transform_5, window_bounds = array<i64: 4, 128>}, {transform_indices = @transform_6, window_bounds = array<i64: 8, 128>}]} {
    %c0 = arith.constant 0 : index
    %c0_0 = arith.constant 0 : index
    %0 = vector.load %arg6[%c0, %c0_0] : memref<4x128xf32, #tpu.memory_space<vmem>>, vector<4x128xf32>
    %1 = vector.extract_strided_slice %0 {offsets = [0, 0], sizes = [1, 128], strides = [1, 1]} : vector<4x128xf32> to vector<1x128xf32>
    %2 = vector.extract_strided_slice %0 {offsets = [1, 0], sizes = [1, 128], strides = [1, 1]} : vector<4x128xf32> to vector<1x128xf32>
    %3 = vector.extract_strided_slice %0 {offsets = [2, 0], sizes = [1, 128], strides = [1, 1]} : vector<4x128xf32> to vector<1x128xf32>
    %4 = vector.extract_strided_slice %0 {offsets = [3, 0], sizes = [1, 128], strides = [1, 1]} : vector<4x128xf32> to vector<1x128xf32>
    %c0_1 = arith.constant 0 : index
    %c0_2 = arith.constant 0 : index
    %5 = vector.load %arg1[%c0_1, %c0_2] : memref<8x8xf32, #tpu.memory_space<vmem>>, vector<8x8xf32>
    %c0_3 = arith.constant 0 : index
    %c0_4 = arith.constant 0 : index
    %6 = vector.load %arg2[%c0_3, %c0_4] : memref<8x128xf32, #tpu.memory_space<vmem>>, vector<8x128xf32>
    %cst = arith.constant dense<0.000000e+00> : vector<8x128xf32>
    %7 = tpu.matmul %5, %6, %cst {dimension_numbers = #tpu.dot_dimension_numbers<[1], [0], [0], [1], [0, 0, 1, 1], [], []>} : vector<8x8xf32>, vector<8x128xf32>, vector<8x128xf32> -> vector<8x128xf32>
    %8 = vector.broadcast %1 : vector<1x128xf32> to vector<8x128xf32>
    %9 = arith.addf %7, %8 : vector<8x128xf32>
    %cst_5 = arith.constant 0.000000e+00 : f32
    %10 = vector.broadcast %cst_5 : f32 to vector<8x128xf32>
    %11 = arith.maximumf %9, %10 : vector<8x128xf32>
    %c0_6 = arith.constant 0 : index
    %c0_7 = arith.constant 0 : index
    %12 = vector.load %arg3[%c0_6, %c0_7] : memref<128x128xf32, #tpu.memory_space<vmem>>, vector<128x128xf32>
    %cst_8 = arith.constant dense<0.000000e+00> : vector<8x128xf32>
    %13 = tpu.matmul %11, %12, %cst_8 {dimension_numbers = #tpu.dot_dimension_numbers<[1], [0], [0], [1], [0, 0, 1, 1], [], []>} : vector<8x128xf32>, vector<128x128xf32>, vector<8x128xf32> -> vector<8x128xf32>
    %14 = vector.broadcast %2 : vector<1x128xf32> to vector<8x128xf32>
    %15 = arith.addf %13, %14 : vector<8x128xf32>
    %cst_9 = arith.constant 0.000000e+00 : f32
    %16 = vector.broadcast %cst_9 : f32 to vector<8x128xf32>
    %17 = arith.maximumf %15, %16 : vector<8x128xf32>
    %c0_10 = arith.constant 0 : index
    %c0_11 = arith.constant 0 : index
    %18 = vector.load %arg4[%c0_10, %c0_11] : memref<128x128xf32, #tpu.memory_space<vmem>>, vector<128x128xf32>
    %cst_12 = arith.constant dense<0.000000e+00> : vector<8x128xf32>
    %19 = tpu.matmul %17, %18, %cst_12 {dimension_numbers = #tpu.dot_dimension_numbers<[1], [0], [0], [1], [0, 0, 1, 1], [], []>} : vector<8x128xf32>, vector<128x128xf32>, vector<8x128xf32> -> vector<8x128xf32>
    %20 = vector.broadcast %3 : vector<1x128xf32> to vector<8x128xf32>
    %21 = arith.addf %19, %20 : vector<8x128xf32>
    %cst_13 = arith.constant 0.000000e+00 : f32
    %22 = vector.broadcast %cst_13 : f32 to vector<8x128xf32>
    %23 = arith.maximumf %21, %22 : vector<8x128xf32>
    %c0_14 = arith.constant 0 : index
    %c0_15 = arith.constant 0 : index
    %24 = vector.load %arg5[%c0_14, %c0_15] : memref<128x128xf32, #tpu.memory_space<vmem>>, vector<128x128xf32>
    %cst_16 = arith.constant dense<0.000000e+00> : vector<8x128xf32>
    %25 = tpu.matmul %23, %24, %cst_16 {dimension_numbers = #tpu.dot_dimension_numbers<[1], [0], [0], [1], [0, 0, 1, 1], [], []>} : vector<8x128xf32>, vector<128x128xf32>, vector<8x128xf32> -> vector<8x128xf32>
    %26 = vector.broadcast %4 : vector<1x128xf32> to vector<8x128xf32>
    %27 = arith.addf %25, %26 : vector<8x128xf32>
    %cst_17 = arith.constant 0.000000e+00 : f32
    %28 = vector.broadcast %cst_17 : f32 to vector<8x128xf32>
    %29 = arith.maximumf %27, %28 : vector<8x128xf32>
    %c0_18 = arith.constant 0 : index
    %c0_19 = arith.constant 0 : index
    %30 = vector.load %arg7[%c0_18, %c0_19] : memref<8x128xf32, #tpu.memory_space<vmem>>, vector<8x128xf32>
    tpu.vector_store %arg7[%c0_18, %c0_19], %29 {strides = array<i32>} : memref<8x128xf32, #tpu.memory_space<vmem>>, vector<8x128xf32>,
    return
  }
  func.func @transform_0(%arg0: i32) -> (i32, i32) {
    %c0_i32 = arith.constant 0 : i32
    %c0_i32_0 = arith.constant 0 : i32
    return %arg0, %c0_i32 : i32, i32
  }
  func.func @transform_1(%arg0: i32) -> (i32, i32) {
    %c0_i32 = arith.constant 0 : i32
    %c0_i32_0 = arith.constant 0 : i32
    %c0_i32_1 = arith.constant 0 : i32
    return %c0_i32, %c0_i32_0 : i32, i32
  }
  func.func @transform_2(%arg0: i32) -> (i32, i32) {
    %c0_i32 = arith.constant 0 : i32
    %c0_i32_0 = arith.constant 0 : i32
    %c0_i32_1 = arith.constant 0 : i32
    return %c0_i32, %c0_i32_0 : i32, i32
  }
  func.func @transform_3(%arg0: i32) -> (i32, i32) {
    %c0_i32 = arith.constant 0 : i32
    %c0_i32_0 = arith.constant 0 : i32
    %c0_i32_1 = arith.constant 0 : i32
    return %c0_i32, %c0_i32_0 : i32, i32
  }
  func.func @transform_4(%arg0: i32) -> (i32, i32) {
    %c0_i32 = arith.constant 0 : i32
    %c0_i32_0 = arith.constant 0 : i32
    %c0_i32_1 = arith.constant 0 : i32
    return %c0_i32, %c0_i32_0 : i32, i32
  }
  func.func @transform_5(%arg0: i32) -> (i32, i32) {
    %c0_i32 = arith.constant 0 : i32
    %c0_i32_0 = arith.constant 0 : i32
    %c0_i32_1 = arith.constant 0 : i32
    return %c0_i32, %c0_i32_0 : i32, i32
  }
  func.func @transform_6(%arg0: i32) -> (i32, i32) {
    %c0_i32 = arith.constant 0 : i32
    %c0_i32_0 = arith.constant 0 : i32
    return %arg0, %c0_i32 : i32, i32
  }
}

module attributes {stable_mosaic.version = 11 : i64} {
  func.func @decoder_kernel(%arg0: i32, %arg1: memref<8x8xf32, #tpu.memory_space<vmem>>, %arg2: memref<8x128xf32, #tpu.memory_space<vmem>>, %arg3: memref<128x128xf32, #tpu.memory_space<vmem>>, %arg4: memref<128x128xf32, #tpu.memory_space<vmem>>, %arg5: memref<128x128xf32, #tpu.memory_space<vmem>>, %arg6: memref<4x128xf32, #tpu.memory_space<vmem>>, %arg7: memref<8x128xf32, #tpu.memory_space<vmem>>) attributes {dimension_semantics = [#tpu.dimension_semantics<parallel>], iteration_bounds = array<i64: 1>, scalar_prefetch = 0 : i64, scratch_operands = 0 : i64, tpu.core_type = #tpu.core_type<tc>, window_params = [{transform_indices = @transform_0, window_bounds = array<i64: 8, 8>}, {pipeline_mode = #tpu.pipeline_mode<synchronous>, transform_indices = @transform_1, window_bounds = array<i64: 8, 128>}, {pipeline_mode = #tpu.pipeline_mode<synchronous>, transform_indices = @transform_2, window_bounds = array<i64: 128, 128>}, {pipeline_mode = #tpu.pipeline_mode<synchronous>, transform_indices = @transform_3, window_bounds = array<i64: 128, 128>}, {pipeline_mode = #tpu.pipeline_mode<synchronous>, transform_indices = @transform_4, window_bounds = array<i64: 128, 128>}, {pipeline_mode = #tpu.pipeline_mode<synchronous>, transform_indices = @transform_5, window_bounds = array<i64: 4, 128>}, {transform_indices = @transform_6, window_bounds = array<i64: 8, 128>}]} {
    %c0 = arith.constant 0 : index
    %c0_0 = arith.constant 0 : index
    %0 = vector.load %arg6[%c0, %c0_0] : memref<4x128xf32, #tpu.memory_space<vmem>>, vector<4x128xf32>
    %1 = vector.extract_strided_slice %0 {offsets = [0, 0], sizes = [1, 128], strides = [1, 1]} : vector<4x128xf32> to vector<1x128xf32>
    %2 = vector.extract_strided_slice %0 {offsets = [1, 0], sizes = [1, 128], strides = [1, 1]} : vector<4x128xf32> to vector<1x128xf32>
    %3 = vector.extract_strided_slice %0 {offsets = [2, 0], sizes = [1, 128], strides = [1, 1]} : vector<4x128xf32> to vector<1x128xf32>
    %4 = vector.extract_strided_slice %0 {offsets = [3, 0], sizes = [1, 128], strides = [1, 1]} : vector<4x128xf32> to vector<1x128xf32>
    %c0_1 = arith.constant 0 : index
    %c0_2 = arith.constant 0 : index
    %5 = vector.load %arg1[%c0_1, %c0_2] : memref<8x8xf32, #tpu.memory_space<vmem>>, vector<8x8xf32>
    %c0_3 = arith.constant 0 : index
    %c0_4 = arith.constant 0 : index
    %6 = vector.load %arg2[%c0_3, %c0_4] : memref<8x128xf32, #tpu.memory_space<vmem>>, vector<8x128xf32>
    %cst = arith.constant dense<0.000000e+00> : vector<8x128xf32>
    %7 = tpu.matmul %5, %6, %cst {dimension_numbers = #tpu.dot_dimension_numbers<[1], [0], [0], [1], [0, 0, 1, 1], [], []>} : vector<8x8xf32>, vector<8x128xf32>, vector<8x128xf32> -> vector<8x128xf32>
    %8 = vector.broadcast %1 : vector<1x128xf32> to vector<8x128xf32>
    %9 = arith.addf %7, %8 : vector<8x128xf32>
    %cst_5 = arith.constant 0.000000e+00 : f32
    %10 = vector.broadcast %cst_5 : f32 to vector<8x128xf32>
    %11 = arith.maximumf %9, %10 : vector<8x128xf32>
    %c0_6 = arith.constant 0 : index
    %c0_7 = arith.constant 0 : index
    %12 = vector.load %arg3[%c0_6, %c0_7] : memref<128x128xf32, #tpu.memory_space<vmem>>, vector<128x128xf32>
    %cst_8 = arith.constant dense<0.000000e+00> : vector<8x128xf32>
    %13 = tpu.matmul %11, %12, %cst_8 {dimension_numbers = #tpu.dot_dimension_numbers<[1], [0], [0], [1], [0, 0, 1, 1], [], []>} : vector<8x128xf32>, vector<128x128xf32>, vector<8x128xf32> -> vector<8x128xf32>
    %14 = vector.broadcast %2 : vector<1x128xf32> to vector<8x128xf32>
    %15 = arith.addf %13, %14 : vector<8x128xf32>
    %cst_9 = arith.constant 0.000000e+00 : f32
    %16 = vector.broadcast %cst_9 : f32 to vector<8x128xf32>
    %17 = arith.maximumf %15, %16 : vector<8x128xf32>
    %c0_10 = arith.constant 0 : index
    %c0_11 = arith.constant 0 : index
    %18 = vector.load %arg4[%c0_10, %c0_11] : memref<128x128xf32, #tpu.memory_space<vmem>>, vector<128x128xf32>
    %cst_12 = arith.constant dense<0.000000e+00> : vector<8x128xf32>
    %19 = tpu.matmul %17, %18, %cst_12 {dimension_numbers = #tpu.dot_dimension_numbers<[1], [0], [0], [1], [0, 0, 1, 1], [], []>} : vector<8x128xf32>, vector<128x128xf32>, vector<8x128xf32> -> vector<8x128xf32>
    %20 = vector.broadcast %3 : vector<1x128xf32> to vector<8x128xf32>
    %21 = arith.addf %19, %20 : vector<8x128xf32>
    %cst_13 = arith.constant 0.000000e+00 : f32
    %22 = vector.broadcast %cst_13 : f32 to vector<8x128xf32>
    %23 = arith.maximumf %21, %22 : vector<8x128xf32>
    %c0_14 = arith.constant 0 : index
    %c0_15 = arith.constant 0 : index
    %24 = vector.load %arg5[%c0_14, %c0_15] : memref<128x128xf32, #tpu.memory_space<vmem>>, vector<128x128xf32>
    %cst_16 = arith.constant dense<0.000000e+00> : vector<8x128xf32>
    %25 = tpu.matmul %23, %24, %cst_16 {dimension_numbers = #tpu.dot_dimension_numbers<[1], [0], [0], [1], [0, 0, 1, 1], [], []>} : vector<8x128xf32>, vector<128x128xf32>, vector<8x128xf32> -> vector<8x128xf32>
    %26 = vector.broadcast %4 : vector<1x128xf32> to vector<8x128xf32>
    %27 = arith.addf %25, %26 : vector<8x128xf32>
    %cst_17 = arith.constant 0.000000e+00 : f32
    %28 = vector.broadcast %cst_17 : f32 to vector<8x128xf32>
    %29 = arith.maximumf %27, %28 : vector<8x128xf32>
    %c0_18 = arith.constant 0 : index
    %c0_19 = arith.constant 0 : index
    %30 = vector.load %arg7[%c0_18, %c0_19] : memref<8x128xf32, #tpu.memory_space<vmem>>, vector<8x128xf32>
    tpu.vector_store %arg7[%c0_18, %c0_19], %29 {strides = array<i32>} : memref<8x128xf32, #tpu.memory_space<vmem>>, vector<8x128xf32>,
    return
  }
  func.func @transform_0(%arg0: i32) -> (i32, i32) {
    %c0_i32 = arith.constant 0 : i32
    %c0_i32_0 = arith.constant 0 : i32
    return %arg0, %c0_i32 : i32, i32
  }
  func.func @transform_1(%arg0: i32) -> (i32, i32) {
    %c0_i32 = arith.constant 0 : i32
    %c0_i32_0 = arith.constant 0 : i32
    %c0_i32_1 = arith.constant 0 : i32
    return %c0_i32, %c0_i32_0 : i32, i32
  }
  func.func @transform_2(%arg0: i32) -> (i32, i32) {
    %c0_i32 = arith.constant 0 : i32
    %c0_i32_0 = arith.constant 0 : i32
    %c0_i32_1 = arith.constant 0 : i32
    return %c0_i32, %c0_i32_0 : i32, i32
  }
  func.func @transform_3(%arg0: i32) -> (i32, i32) {
    %c0_i32 = arith.constant 0 : i32
    %c0_i32_0 = arith.constant 0 : i32
    %c0_i32_1 = arith.constant 0 : i32
    return %c0_i32, %c0_i32_0 : i32, i32
  }
  func.func @transform_4(%arg0: i32) -> (i32, i32) {
    %c0_i32 = arith.constant 0 : i32
    %c0_i32_0 = arith.constant 0 : i32
    %c0_i32_1 = arith.constant 0 : i32
    return %c0_i32, %c0_i32_0 : i32, i32
  }
  func.func @transform_5(%arg0: i32) -> (i32, i32) {
    %c0_i32 = arith.constant 0 : i32
    %c0_i32_0 = arith.constant 0 : i32
    %c0_i32_1 = arith.constant 0 : i32
    return %c0_i32, %c0_i32_0 : i32, i32
  }
  func.func @transform_6(%arg0: i32) -> (i32, i32) {
    %c0_i32 = arith.constant 0 : i32
    %c0_i32_0 = arith.constant 0 : i32
    return %arg0, %c0_i32 : i32, i32
  }
}

</mosaic_0001>

<llo_original>
// kernel: tpu_custom_call.1
$region0: #{tpu_custom_call.1}
  #allocation0 [shape = 'u32[]', space=smem, size = 0x4, offset = 0x4, fixed_abs, tag = 'smem constant byte address 0x4 - core index']
  #allocation1 [shape = 'u32[144,128]{1,0:T(1,128)}', space=vmem, size = 0x12000, scoped, tag = 'internal scratch']
  %s0 = inlined_call_operand.hbm [shape: f32[8,8], index: 0, kind: input, shape index: {}]
  %s1 = inlined_call_operand.hbm [shape: f32[8,128], index: 1, kind: input, shape index: {}]
  %s2 = inlined_call_operand.hbm [shape: f32[128,128], index: 2, kind: input, shape index: {}]
  %s3 = inlined_call_operand.hbm [shape: f32[128,128], index: 3, kind: input, shape index: {}]
  %s4 = inlined_call_operand.hbm [shape: f32[128,128], index: 4, kind: input, shape index: {}]
  %s5 = inlined_call_operand.vmem [shape: f32[4,128], index: 5, kind: input, shape index: {}]
  %s6 = inlined_call_operand.hbm [shape: f32[8,128], index: 6, kind: output, shape index: {}]
  %s7 = sld [smem:[#allocation0]]
  $region54: #{tpu_custom_call.1} parent=0
    _
  %s9 = ssub.s32 1, %s7
  %s10 = scalar_select 0, %s9, %s7
  $region1: #{tpu_custom_call.1} parent=0
    #allocation2 [shape = 'u8[4096]{0}', space=vmem, size = 0x1000, scoped, tag = 'input window, operand 0, single buffered']
    #allocation3 [shape = 's32[1]{0}', space=sflag, size = 0x4, scoped, tag = 'scoped memory for tpu_custom_call.1']
    #allocation4 [shape = 's32[1]{0}', space=sflag, size = 0x4, scoped, tag = 'scoped memory for tpu_custom_call.1']
    #allocation5 [shape = 'u8[4096]{0}', space=vmem, size = 0x1000, scoped, tag = 'input window, operand 1, single buffered']
    #allocation6 [shape = 's32[1]{0}', space=sflag, size = 0x4, scoped, tag = 'scoped memory for tpu_custom_call.1']
    #allocation7 [shape = 'u8[65536]{0}', space=vmem, size = 0x10000, scoped, tag = 'input window, operand 2, single buffered']
    #allocation8 [shape = 'u8[65536]{0}', space=vmem, size = 0x10000, scoped, tag = 'input window, operand 3, single buffered']
    #allocation9 [shape = 's32[1]{0}', space=sflag, size = 0x4, scoped, tag = 'scoped memory for tpu_custom_call.1']
    #allocation10 [shape = 'u8[65536]{0}', space=vmem, size = 0x10000, scoped, tag = 'input window, operand 4, single buffered']
    #allocation11 [shape = 'u8[4096]{0}', space=vmem, size = 0x1000, scoped, tag = 'output window, operand 0, single buffered']
    %11 = vsyncpa [#allocation3], 0
    %12 = vsyncpa [#allocation6], 0
    %13 = vsyncpa [#allocation9], 0
    %14 = vsyncpa [#allocation4], 0
    // Predicated region
    $region2: #{tpu_custom_call.1} parent=1 // pred_check
      _
    $region3: #{tpu_custom_call.1} parent=1 // pred_check_branch
      %16 = sbr.rel (0) target = $region5
    $region4: #{tpu_custom_call.1} parent=1 // pred_region
      %s18 = ssub.s32 128, 128
      %19 = vsyncadd [#allocation3], %s18
      %s21 = sshll.u32 [#allocation2], 4
      %s22 = int_to_ptr.vmem [resolvable:$true] %s21
      %24 = dma.hbm_to_vmem [thread:$0]  %s0, 128, %s22, [#allocation3]
    $region5: #{tpu_custom_call.1} parent=1 // pred_fallthru
      _
    // Predicated region
    $region6: #{tpu_custom_call.1} parent=1 // pred_check
      _
    $region7: #{tpu_custom_call.1} parent=1 // pred_check_branch
      %26 = sbr.rel (0) target = $region9
    $region8: #{tpu_custom_call.1} parent=1 // pred_region
      %s28 = ssub.s32 128, 128
      %29 = vsyncadd [#allocation6], %s28
      %s31 = sshll.u32 [#allocation5], 4
      %s32 = int_to_ptr.vmem [resolvable:$true] %s31
      %34 = dma.hbm_to_vmem [thread:$0]  %s1, 128, %s32, [#allocation6]
    $region9: #{tpu_custom_call.1} parent=1 // pred_fallthru
      _
    // Predicated region
    $region10: #{tpu_custom_call.1} parent=1 // pred_check
      _
    $region11: #{tpu_custom_call.1} parent=1 // pred_check_branch
      %36 = sbr.rel (0) target = $region13
    $region12: #{tpu_custom_call.1} parent=1 // pred_region
      %s38 = ssub.s32 2048, 2048
      %39 = vsyncadd [#allocation6], %s38
      %s40 = sshll.u32 [#allocation7], 4
      %s41 = int_to_ptr.vmem [resolvable:$true] %s40
      %46 = dma.hbm_to_vmem [thread:$0]  %s2, 2048, %s41, [#allocation6], 128, 128, 8
    $region13: #{tpu_custom_call.1} parent=1 // pred_fallthru
      _
    // Predicated region
    $region14: #{tpu_custom_call.1} parent=1 // pred_check
      _
    $region15: #{tpu_custom_call.1} parent=1 // pred_check_branch
      %48 = sbr.rel (0) target = $region17
    $region16: #{tpu_custom_call.1} parent=1 // pred_region
      %s50 = ssub.s32 2048, 2048
      %51 = vsyncadd [#allocation9], %s50
      %s52 = sshll.u32 [#allocation8], 4
      %s53 = int_to_ptr.vmem [resolvable:$true] %s52
      %58 = dma.hbm_to_vmem [thread:$0]  %s3, 2048, %s53, [#allocation9], 128, 128, 8
    $region17: #{tpu_custom_call.1} parent=1 // pred_fallthru
      _
    // Predicated region
    $region18: #{tpu_custom_call.1} parent=1 // pred_check
      _
    $region19: #{tpu_custom_call.1} parent=1 // pred_check_branch
      %60 = sbr.rel (0) target = $region21
    $region20: #{tpu_custom_call.1} parent=1 // pred_region
      %s62 = ssub.s32 2048, 2048
      %63 = vsyncadd [#allocation9], %s62
      %s64 = sshll.u32 [#allocation10], 4
      %s65 = int_to_ptr.vmem [resolvable:$true] %s64
      %70 = dma.hbm_to_vmem [thread:$0]  %s4, 2048, %s65, [#allocation9], 128, 128, 8
    $region21: #{tpu_custom_call.1} parent=1 // pred_fallthru
      _
    // Predicated region
    $region22: #{tpu_custom_call.1} parent=1 // pred_check
      _
    $region23: #{tpu_custom_call.1} parent=1 // pred_check_branch
      %72 = sbr.rel (0) target = $region25
    $region24: #{tpu_custom_call.1} parent=1 // pred_region
      _
    $region25: #{tpu_custom_call.1} parent=1 // pred_fallthru
      _
    // Predicated region
    $region26: #{tpu_custom_call.1} parent=1 // pred_check
      _
    $region27: #{tpu_custom_call.1} parent=1 // pred_check_branch
      %74 = sbr.rel (0) target = $region29
    $region28: #{tpu_custom_call.1} parent=1 // pred_region
      %75 = dma.done [#allocation3], 128
    $region29: #{tpu_custom_call.1} parent=1 // pred_fallthru
      _
    // Predicated region
    $region30: #{tpu_custom_call.1} parent=1 // pred_check
      _
    $region31: #{tpu_custom_call.1} parent=1 // pred_check_branch
      %77 = sbr.rel (0) target = $region33
    $region32: #{tpu_custom_call.1} parent=1 // pred_region
      %78 = dma.done [#allocation6], 128
    $region33: #{tpu_custom_call.1} parent=1 // pred_fallthru
      _
    // Predicated region
    $region34: #{tpu_custom_call.1} parent=1 // pred_check
      _
    $region35: #{tpu_custom_call.1} parent=1 // pred_check_branch
      %80 = sbr.rel (0) target = $region37
    $region36: #{tpu_custom_call.1} parent=1 // pred_region
      %81 = dma.done [#allocation6], 2048
    $region37: #{tpu_custom_call.1} parent=1 // pred_fallthru
      _
    // Predicated region
    $region38: #{tpu_custom_call.1} parent=1 // pred_check
      _
    $region39: #{tpu_custom_call.1} parent=1 // pred_check_branch
      %83 = sbr.rel (0) target = $region41
    $region40: #{tpu_custom_call.1} parent=1 // pred_region
      %84 = dma.done [#allocation9], 2048
    $region41: #{tpu_custom_call.1} parent=1 // pred_fallthru
      _
    // Predicated region
    $region42: #{tpu_custom_call.1} parent=1 // pred_check
      _
    $region43: #{tpu_custom_call.1} parent=1 // pred_check_branch
      %86 = sbr.rel (0) target = $region45
    $region44: #{tpu_custom_call.1} parent=1 // pred_region
      %87 = dma.done [#allocation9], 2048
    $region45: #{tpu_custom_call.1} parent=1 // pred_fallthru
      _
    %v88 = vld [vmem:[%s5] sm:$0xf]
    %v89 = vld [vmem:[#allocation2] sm:$0xff]
    %v90 = vld [vmem:[#allocation5] sm:$0xff]
    %v91 = vlaneseq
    %v92 = vshrl.u32 %v91, 7
    %v93 = vsub.s32 0, %v92
    %v94 = vrot.slane %v88, %v93
    %vm95 = vcmask 64512
    %v97 = vsel %vm95, %v89, 0
    %99 = vmatprep.subr.mxu0 0.0
    %100 = vmatpush1.msra.mxu0 %v90
    %101 = vmatprep.subr.mxu0 0.0
    %102 = vmatpush1.msra.mxu0 0.0
    %103 = vmatprep.subr.mxu0 0.0
    %104 = vmatpush1.msra.mxu0 0.0
    %105 = vmatprep.subr.mxu0 0.0
    %106 = vmatpush1.msra.mxu0 0.0
    %107 = vmatprep.subr.mxu0 0.0
    %108 = vmatpush1.msra.mxu0 0.0
    %109 = vmatprep.subr.mxu0 0.0
    %110 = vmatpush1.msra.mxu0 0.0
    %111 = vmatprep.subr.mxu0 0.0
    %112 = vmatpush1.msra.mxu0 0.0
    %113 = vmatprep.subr.mxu0 0.0
    %114 = vmatpush1.msra.mxu0 0.0
    %115 = vmatprep.subr.mxu0 0.0
    %116 = vmatpush1.msra.mxu0 0.0
    %117 = vmatprep.subr.mxu0 0.0
    %118 = vmatpush1.msra.mxu0 0.0
    %119 = vmatprep.subr.mxu0 0.0
    %120 = vmatpush1.msra.mxu0 0.0
    %121 = vmatprep.subr.mxu0 0.0
    %122 = vmatpush1.msra.mxu0 0.0
    %123 = vmatprep.subr.mxu0 0.0
    %124 = vmatpush1.msra.mxu0 0.0
    %125 = vmatprep.subr.mxu0 0.0
    %126 = vmatpush1.msra.mxu0 0.0
    %127 = vmatprep.subr.mxu0 0.0
    %128 = vmatpush1.msra.mxu0 0.0
    %129 = vmatprep.subr.mxu0 0.0
    %130 = vmatpush1.msra.mxu0 0.0
    %131 = vmatprep.subr.mxu0 0.0
    %132 = vmatpush1.msra.mxu0 0.0
    %133 = vmatprep.subr.mxu0 0.0
    %134 = vmatpush1.msra.mxu0 0.0
    %135 = vmatprep.subr.mxu0 0.0
    %136 = vmatpush1.msra.mxu0 0.0
    %137 = vmatprep.subr.mxu0 0.0
    %138 = vmatpush1.msra.mxu0 0.0
    %139 = vmatprep.subr.mxu0 0.0
    %140 = vmatpush1.msra.mxu0 0.0
    %141 = vmatprep.subr.mxu0 0.0
    %142 = vmatpush1.msra.mxu0 0.0
    %143 = vmatprep.subr.mxu0 0.0
    %144 = vmatpush1.msra.mxu0 0.0
    %145 = vmatprep.subr.mxu0 0.0
    %146 = vmatpush1.msra.mxu0 0.0
    %147 = vmatprep.subr.mxu0 0.0
    %148 = vmatpush1.msra.mxu0 0.0
    %149 = vmatprep.subr.mxu0 0.0
    %150 = vmatpush1.msra.mxu0 0.0
    %151 = vmatprep.subr.mxu0 0.0
    %152 = vmatpush1.msra.mxu0 0.0
    %153 = vmatprep.subr.mxu0 0.0
    %154 = vmatpush1.msra.mxu0 0.0
    %155 = vmatprep.subr.mxu0 0.0
    %156 = vmatpush1.msra.mxu0 0.0
    %157 = vmatprep.subr.mxu0 0.0
    %158 = vmatpush1.msra.mxu0 0.0
    %159 = vmatprep.subr.mxu0 0.0
    %160 = vmatpush1.msra.mxu0 0.0
    %161 = vmatprep.subr.mxu0 0.0
    %162 = vmatpush1.msra.mxu0 0.0
    %163 = vmatprep.mubr.f32.mxu0 0.0
    %164 = vmatmul.mubr.f32.gmra.mrb[0].mxu0 %v97
    %v165 = vpop.f32.mrb[0].mxu0
    %v166 = vadd.f32 %v94, %v165
    %v167 = vpop.f32.mrb[0].mxu0
    %168 = vdwg.mxu0
    %v169 = vmax.f32 %v166, 0.0
    %v170 = vld [vmem:[#allocation7] sm:$0xff]
    %v171 = vld [vmem:[#allocation7 + $0x8] sm:$0xff]
    %v172 = vld [vmem:[#allocation7 + $0x10] sm:$0xff]
    %v173 = vld [vmem:[#allocation7 + $0x18] sm:$0xff]
    %v174 = vld [vmem:[#allocation7 + $0x20] sm:$0xff]
    %v175 = vld [vmem:[#allocation7 + $0x28] sm:$0xff]
    %v176 = vld [vmem:[#allocation7 + $0x30] sm:$0xff]
    %v177 = vld [vmem:[#allocation7 + $0x38] sm:$0xff]
    %v178 = vld [vmem:[#allocation7 + $0x40] sm:$0xff]
    %v179 = vld [vmem:[#allocation7 + $0x48] sm:$0xff]
    %v180 = vld [vmem:[#allocation7 + $0x50] sm:$0xff]
    %v181 = vld [vmem:[#allocation7 + $0x58] sm:$0xff]
    %v182 = vld [vmem:[#allocation7 + $0x60] sm:$0xff]
    %v183 = vld [vmem:[#allocation7 + $0x68] sm:$0xff]
    %v184 = vld [vmem:[#allocation7 + $0x70] sm:$0xff]
    %v185 = vld [vmem:[#allocation7 + $0x78] sm:$0xff]
    %v186 = vlaneseq
    %v187 = vshrl.u32 %v186, 7
    %v188 = vsub.s32 1, %v187
    %v189 = vrot.slane %v88, %v188
    %190 = vmatprep.subr.mxu0 0.0
    %191 = vmatpush1.msra.mxu0 %v170
    %192 = vmatprep.subr.mxu0 0.0
    %193 = vmatpush1.msra.mxu0 %v171
    %194 = vmatprep.subr.mxu0 0.0
    %195 = vmatpush1.msra.mxu0 %v172
    %196 = vmatprep.subr.mxu0 0.0
    %197 = vmatpush1.msra.mxu0 %v173
    %198 = vmatprep.subr.mxu0 0.0
    %199 = vmatpush1.msra.mxu0 %v174
    %200 = vmatprep.subr.mxu0 0.0
    %201 = vmatpush1.msra.mxu0 %v175
    %202 = vmatprep.subr.mxu0 0.0
    %203 = vmatpush1.msra.mxu0 %v176
    %204 = vmatprep.subr.mxu0 0.0
    %205 = vmatpush1.msra.mxu0 %v177
    %206 = vmatprep.subr.mxu0 0.0
    %207 = vmatpush1.msra.mxu0 %v178
    %208 = vmatprep.subr.mxu0 0.0
    %209 = vmatpush1.msra.mxu0 %v179
    %210 = vmatprep.subr.mxu0 0.0
    %211 = vmatpush1.msra.mxu0 %v180
    %212 = vmatprep.subr.mxu0 0.0
    %213 = vmatpush1.msra.mxu0 %v181
    %214 = vmatprep.subr.mxu0 0.0
    %215 = vmatpush1.msra.mxu0 %v182
    %216 = vmatprep.subr.mxu0 0.0
    %217 = vmatpush1.msra.mxu0 %v183
    %218 = vmatprep.subr.mxu0 0.0
    %219 = vmatpush1.msra.mxu0 %v184
    %220 = vmatprep.subr.mxu0 0.0
    %221 = vmatpush1.msra.mxu0 %v185
    %222 = vmatprep.subr.mxu0 0.0
    %223 = vmatpush1.msra.mxu0 0.0
    %224 = vmatprep.subr.mxu0 0.0
    %225 = vmatpush1.msra.mxu0 0.0
    %226 = vmatprep.subr.mxu0 0.0
    %227 = vmatpush1.msra.mxu0 0.0
    %228 = vmatprep.subr.mxu0 0.0
    %229 = vmatpush1.msra.mxu0 0.0
    %230 = vmatprep.subr.mxu0 0.0
    %231 = vmatpush1.msra.mxu0 0.0
    %232 = vmatprep.subr.mxu0 0.0
    %233 = vmatpush1.msra.mxu0 0.0
    %234 = vmatprep.subr.mxu0 0.0
    %235 = vmatpush1.msra.mxu0 0.0
    %236 = vmatprep.subr.mxu0 0.0
    %237 = vmatpush1.msra.mxu0 0.0
    %238 = vmatprep.subr.mxu0 0.0
    %239 = vmatpush1.msra.mxu0 0.0
    %240 = vmatprep.subr.mxu0 0.0
    %241 = vmatpush1.msra.mxu0 0.0
    %242 = vmatprep.subr.mxu0 0.0
    %243 = vmatpush1.msra.mxu0 0.0
    %244 = vmatprep.subr.mxu0 0.0
    %245 = vmatpush1.msra.mxu0 0.0
    %246 = vmatprep.subr.mxu0 0.0
    %247 = vmatpush1.msra.mxu0 0.0
    %248 = vmatprep.subr.mxu0 0.0
    %249 = vmatpush1.msra.mxu0 0.0
    %250 = vmatprep.subr.mxu0 0.0
    %251 = vmatpush1.msra.mxu0 0.0
    %252 = vmatprep.subr.mxu0 0.0
    %253 = vmatpush1.msra.mxu0 0.0
    %254 = vmatprep.mubr.f32.mxu0 0.0
    %255 = vmatmul.mubr.f32.gmra.mrb[0].mxu0 %v169
    %v256 = vpop.f32.mrb[0].mxu0
    %v257 = vadd.f32 %v189, %v256
    %v258 = vpop.f32.mrb[0].mxu0
    %259 = vdwg.mxu0
    %v260 = vmax.f32 %v257, 0.0
    %v261 = vld [vmem:[#allocation8] sm:$0xff]
    %v262 = vld [vmem:[#allocation8 + $0x8] sm:$0xff]
    %v263 = vld [vmem:[#allocation8 + $0x10] sm:$0xff]
    %v264 = vld [vmem:[#allocation8 + $0x18] sm:$0xff]
    %v265 = vld [vmem:[#allocation8 + $0x20] sm:$0xff]
    %v266 = vld [vmem:[#allocation8 + $0x28] sm:$0xff]
    %v267 = vld [vmem:[#allocation8 + $0x30] sm:$0xff]
    %v268 = vld [vmem:[#allocation8 + $0x38] sm:$0xff]
    %v269 = vld [vmem:[#allocation8 + $0x40] sm:$0xff]
    %v270 = vld [vmem:[#allocation8 + $0x48] sm:$0xff]
    %v271 = vld [vmem:[#allocation8 + $0x50] sm:$0xff]
    %v272 = vld [vmem:[#allocation8 + $0x58] sm:$0xff]
    %v273 = vld [vmem:[#allocation8 + $0x60] sm:$0xff]
    %v274 = vld [vmem:[#allocation8 + $0x68] sm:$0xff]
    %v275 = vld [vmem:[#allocation8 + $0x70] sm:$0xff]
    %v276 = vld [vmem:[#allocation8 + $0x78] sm:$0xff]
    %v277 = vlaneseq
    %v278 = vshrl.u32 %v277, 7
    %v279 = vsub.s32 2, %v278
    %v280 = vrot.slane %v88, %v279
    %281 = vmatprep.subr.mxu0 0.0
    %282 = vmatpush1.msra.mxu0 %v261
    %283 = vmatprep.subr.mxu0 0.0
    %284 = vmatpush1.msra.mxu0 %v262
    %285 = vmatprep.subr.mxu0 0.0
    %286 = vmatpush1.msra.mxu0 %v263
    %287 = vmatprep.subr.mxu0 0.0
    %288 = vmatpush1.msra.mxu0 %v264
    %289 = vmatprep.subr.mxu0 0.0
    %290 = vmatpush1.msra.mxu0 %v265
    %291 = vmatprep.subr.mxu0 0.0
    %292 = vmatpush1.msra.mxu0 %v266
    %293 = vmatprep.subr.mxu0 0.0
    %294 = vmatpush1.msra.mxu0 %v267
    %295 = vmatprep.subr.mxu0 0.0
    %296 = vmatpush1.msra.mxu0 %v268
    %297 = vmatprep.subr.mxu0 0.0
    %298 = vmatpush1.msra.mxu0 %v269
    %299 = vmatprep.subr.mxu0 0.0
    %300 = vmatpush1.msra.mxu0 %v270
    %301 = vmatprep.subr.mxu0 0.0
    %302 = vmatpush1.msra.mxu0 %v271
    %303 = vmatprep.subr.mxu0 0.0
    %304 = vmatpush1.msra.mxu0 %v272
    %305 = vmatprep.subr.mxu0 0.0
    %306 = vmatpush1.msra.mxu0 %v273
    %307 = vmatprep.subr.mxu0 0.0
    %308 = vmatpush1.msra.mxu0 %v274
    %309 = vmatprep.subr.mxu0 0.0
    %310 = vmatpush1.msra.mxu0 %v275
    %311 = vmatprep.subr.mxu0 0.0
    %312 = vmatpush1.msra.mxu0 %v276
    %313 = vmatprep.subr.mxu0 0.0
    %314 = vmatpush1.msra.mxu0 0.0
    %315 = vmatprep.subr.mxu0 0.0
    %316 = vmatpush1.msra.mxu0 0.0
    %317 = vmatprep.subr.mxu0 0.0
    %318 = vmatpush1.msra.mxu0 0.0
    %319 = vmatprep.subr.mxu0 0.0
    %320 = vmatpush1.msra.mxu0 0.0
    %321 = vmatprep.subr.mxu0 0.0
    %322 = vmatpush1.msra.mxu0 0.0
    %323 = vmatprep.subr.mxu0 0.0
    %324 = vmatpush1.msra.mxu0 0.0
    %325 = vmatprep.subr.mxu0 0.0
    %326 = vmatpush1.msra.mxu0 0.0
    %327 = vmatprep.subr.mxu0 0.0
    %328 = vmatpush1.msra.mxu0 0.0
    %329 = vmatprep.subr.mxu0 0.0
    %330 = vmatpush1.msra.mxu0 0.0
    %331 = vmatprep.subr.mxu0 0.0
    %332 = vmatpush1.msra.mxu0 0.0
    %333 = vmatprep.subr.mxu0 0.0
    %334 = vmatpush1.msra.mxu0 0.0
    %335 = vmatprep.subr.mxu0 0.0
    %336 = vmatpush1.msra.mxu0 0.0
    %337 = vmatprep.subr.mxu0 0.0
    %338 = vmatpush1.msra.mxu0 0.0
    %339 = vmatprep.subr.mxu0 0.0
    %340 = vmatpush1.msra.mxu0 0.0
    %341 = vmatprep.subr.mxu0 0.0
    %342 = vmatpush1.msra.mxu0 0.0
    %343 = vmatprep.subr.mxu0 0.0
    %344 = vmatpush1.msra.mxu0 0.0
    %345 = vmatprep.mubr.f32.mxu0 0.0
    %346 = vmatmul.mubr.f32.gmra.mrb[0].mxu0 %v260
    %v347 = vpop.f32.mrb[0].mxu0
    %v348 = vadd.f32 %v280, %v347
    %v349 = vpop.f32.mrb[0].mxu0
    %350 = vdwg.mxu0
    %v351 = vmax.f32 %v348, 0.0
    %v352 = vld [vmem:[#allocation10] sm:$0xff]
    %v353 = vld [vmem:[#allocation10 + $0x8] sm:$0xff]
    %v354 = vld [vmem:[#allocation10 + $0x10] sm:$0xff]
    %v355 = vld [vmem:[#allocation10 + $0x18] sm:$0xff]
    %v356 = vld [vmem:[#allocation10 + $0x20] sm:$0xff]
    %v357 = vld [vmem:[#allocation10 + $0x28] sm:$0xff]
    %v358 = vld [vmem:[#allocation10 + $0x30] sm:$0xff]
    %v359 = vld [vmem:[#allocation10 + $0x38] sm:$0xff]
    %v360 = vld [vmem:[#allocation10 + $0x40] sm:$0xff]
    %v361 = vld [vmem:[#allocation10 + $0x48] sm:$0xff]
    %v362 = vld [vmem:[#allocation10 + $0x50] sm:$0xff]
    %v363 = vld [vmem:[#allocation10 + $0x58] sm:$0xff]
    %v364 = vld [vmem:[#allocation10 + $0x60] sm:$0xff]
    %v365 = vld [vmem:[#allocation10 + $0x68] sm:$0xff]
    %v366 = vld [vmem:[#allocation10 + $0x70] sm:$0xff]
    %v367 = vld [vmem:[#allocation10 + $0x78] sm:$0xff]
    %v368 = vlaneseq
    %v369 = vshrl.u32 %v368, 7
    %v370 = vsub.s32 3, %v369
    %v371 = vrot.slane %v88, %v370
    %372 = vmatprep.subr.mxu0 0.0
    %373 = vmatpush1.msra.mxu0 %v352
    %374 = vmatprep.subr.mxu0 0.0
    %375 = vmatpush1.msra.mxu0 %v353
    %376 = vmatprep.subr.mxu0 0.0
    %377 = vmatpush1.msra.mxu0 %v354
    %378 = vmatprep.subr.mxu0 0.0
    %379 = vmatpush1.msra.mxu0 %v355
    %380 = vmatprep.subr.mxu0 0.0
    %381 = vmatpush1.msra.mxu0 %v356
    %382 = vmatprep.subr.mxu0 0.0
    %383 = vmatpush1.msra.mxu0 %v357
    %384 = vmatprep.subr.mxu0 0.0
    %385 = vmatpush1.msra.mxu0 %v358
    %386 = vmatprep.subr.mxu0 0.0
    %387 = vmatpush1.msra.mxu0 %v359
    %388 = vmatprep.subr.mxu0 0.0
    %389 = vmatpush1.msra.mxu0 %v360
    %390 = vmatprep.subr.mxu0 0.0
    %391 = vmatpush1.msra.mxu0 %v361
    %392 = vmatprep.subr.mxu0 0.0
    %393 = vmatpush1.msra.mxu0 %v362
    %394 = vmatprep.subr.mxu0 0.0
    %395 = vmatpush1.msra.mxu0 %v363
    %396 = vmatprep.subr.mxu0 0.0
    %397 = vmatpush1.msra.mxu0 %v364
    %398 = vmatprep.subr.mxu0 0.0
    %399 = vmatpush1.msra.mxu0 %v365
    %400 = vmatprep.subr.mxu0 0.0
    %401 = vmatpush1.msra.mxu0 %v366
    %402 = vmatprep.subr.mxu0 0.0
    %403 = vmatpush1.msra.mxu0 %v367
    %404 = vmatprep.subr.mxu0 0.0
    %405 = vmatpush1.msra.mxu0 0.0
    %406 = vmatprep.subr.mxu0 0.0
    %407 = vmatpush1.msra.mxu0 0.0
    %408 = vmatprep.subr.mxu0 0.0
    %409 = vmatpush1.msra.mxu0 0.0
    %410 = vmatprep.subr.mxu0 0.0
    %411 = vmatpush1.msra.mxu0 0.0
    %412 = vmatprep.subr.mxu0 0.0
    %413 = vmatpush1.msra.mxu0 0.0
    %414 = vmatprep.subr.mxu0 0.0
    %415 = vmatpush1.msra.mxu0 0.0
    %416 = vmatprep.subr.mxu0 0.0
    %417 = vmatpush1.msra.mxu0 0.0
    %418 = vmatprep.subr.mxu0 0.0
    %419 = vmatpush1.msra.mxu0 0.0
    %420 = vmatprep.subr.mxu0 0.0
    %421 = vmatpush1.msra.mxu0 0.0
    %422 = vmatprep.subr.mxu0 0.0
    %423 = vmatpush1.msra.mxu0 0.0
    %424 = vmatprep.subr.mxu0 0.0
    %425 = vmatpush1.msra.mxu0 0.0
    %426 = vmatprep.subr.mxu0 0.0
    %427 = vmatpush1.msra.mxu0 0.0
    %428 = vmatprep.subr.mxu0 0.0
    %429 = vmatpush1.msra.mxu0 0.0
    %430 = vmatprep.subr.mxu0 0.0
    %431 = vmatpush1.msra.mxu0 0.0
    %432 = vmatprep.subr.mxu0 0.0
    %433 = vmatpush1.msra.mxu0 0.0
    %434 = vmatprep.subr.mxu0 0.0
    %435 = vmatpush1.msra.mxu0 0.0
    %436 = vmatprep.mubr.f32.mxu0 0.0
    %437 = vmatmul.mubr.f32.gmra.mrb[0].mxu0 %v351
    %v438 = vpop.f32.mrb[0].mxu0
    %v439 = vadd.f32 %v371, %v438
    %v440 = vpop.f32.mrb[0].mxu0
    %441 = vdwg.mxu0
    %v442 = vmax.f32 %v439, 0.0
    %443 = vst [vmem:[#allocation11] sm:$0xff] %v442
    // Predicated region
    $region46: #{tpu_custom_call.1} parent=1 // pred_check
      _
    $region47: #{tpu_custom_call.1} parent=1 // pred_check_branch
      %445 = sbr.rel (0) target = $region49
    $region48: #{tpu_custom_call.1} parent=1 // pred_region
      %s447 = ssub.s32 128, 128
      %448 = vsyncadd [#allocation4], %s447
      %s450 = sshll.u32 [#allocation11], 4
      %s451 = int_to_ptr.vmem [resolvable:$true] %s450
      %453 = dma.vmem_to_hbm [thread:$0]  %s451, 128, %s6, [#allocation4]
    $region49: #{tpu_custom_call.1} parent=1 // pred_fallthru
      _
    // Predicated region
    $region50: #{tpu_custom_call.1} parent=1 // pred_check
      _
    $region51: #{tpu_custom_call.1} parent=1 // pred_check_branch
      %455 = sbr.rel (0) target = $region53
    $region52: #{tpu_custom_call.1} parent=1 // pred_region
      %456 = dma.done [#allocation4], 128
    $region53: #{tpu_custom_call.1} parent=1 // pred_fallthru
      _
    %457 = vsyncpa [#allocation3], 1
    %458 = vsyncpa [#allocation6], 1
    %459 = vsyncpa [#allocation9], 1
    %460 = vsyncpa [#allocation4], 1

// kernel: tpu_custom_call.1
$region0: #{tpu_custom_call.1}
  #allocation0 [shape = 'u32[]', space=smem, size = 0x4, offset = 0x4, fixed_abs, tag = 'smem constant byte address 0x4 - core index']
  #allocation1 [shape = 'u32[144,128]{1,0:T(1,128)}', space=vmem, size = 0x12000, scoped, tag = 'internal scratch']
  %s0 = inlined_call_operand.hbm [shape: f32[8,8], index: 0, kind: input, shape index: {}]
  %s1 = inlined_call_operand.hbm [shape: f32[8,128], index: 1, kind: input, shape index: {}]
  %s2 = inlined_call_operand.hbm [shape: f32[128,128], index: 2, kind: input, shape index: {}]
  %s3 = inlined_call_operand.hbm [shape: f32[128,128], index: 3, kind: input, shape index: {}]
  %s4 = inlined_call_operand.hbm [shape: f32[128,128], index: 4, kind: input, shape index: {}]
  %s5 = inlined_call_operand.vmem [shape: f32[4,128], index: 5, kind: input, shape index: {}]
  %s6 = inlined_call_operand.hbm [shape: f32[8,128], index: 6, kind: output, shape index: {}]
  %s7 = sld [smem:[#allocation0]]
  $region54: #{tpu_custom_call.1} parent=0
    _
  %s9 = ssub.s32 1, %s7
  %s10 = scalar_select 0, %s9, %s7
  $region1: #{tpu_custom_call.1} parent=0
    #allocation2 [shape = 'u8[4096]{0}', space=vmem, size = 0x1000, scoped, tag = 'input window, operand 0, single buffered']
    #allocation3 [shape = 's32[1]{0}', space=sflag, size = 0x4, scoped, tag = 'scoped memory for tpu_custom_call.1']
    #allocation4 [shape = 's32[1]{0}', space=sflag, size = 0x4, scoped, tag = 'scoped memory for tpu_custom_call.1']
    #allocation5 [shape = 'u8[4096]{0}', space=vmem, size = 0x1000, scoped, tag = 'input window, operand 1, single buffered']
    #allocation6 [shape = 's32[1]{0}', space=sflag, size = 0x4, scoped, tag = 'scoped memory for tpu_custom_call.1']
    #allocation7 [shape = 'u8[65536]{0}', space=vmem, size = 0x10000, scoped, tag = 'input window, operand 2, single buffered']
    #allocation8 [shape = 'u8[65536]{0}', space=vmem, size = 0x10000, scoped, tag = 'input window, operand 3, single buffered']
    #allocation9 [shape = 's32[1]{0}', space=sflag, size = 0x4, scoped, tag = 'scoped memory for tpu_custom_call.1']
    #allocation10 [shape = 'u8[65536]{0}', space=vmem, size = 0x10000, scoped, tag = 'input window, operand 4, single buffered']
    #allocation11 [shape = 'u8[4096]{0}', space=vmem, size = 0x1000, scoped, tag = 'output window, operand 0, single buffered']
    %11 = vsyncpa [#allocation3], 0
    %12 = vsyncpa [#allocation6], 0
    %13 = vsyncpa [#allocation9], 0
    %14 = vsyncpa [#allocation4], 0
    // Predicated region
    $region2: #{tpu_custom_call.1} parent=1 // pred_check
      _
    $region3: #{tpu_custom_call.1} parent=1 // pred_check_branch
      %16 = sbr.rel (0) target = $region5
    $region4: #{tpu_custom_call.1} parent=1 // pred_region
      %s18 = ssub.s32 128, 128
      %19 = vsyncadd [#allocation3], %s18
      %s21 = sshll.u32 [#allocation2], 4
      %s22 = int_to_ptr.vmem [resolvable:$true] %s21
      %24 = dma.hbm_to_vmem [thread:$0]  %s0, 128, %s22, [#allocation3]
    $region5: #{tpu_custom_call.1} parent=1 // pred_fallthru
      _
    // Predicated region
    $region6: #{tpu_custom_call.1} parent=1 // pred_check
      _
    $region7: #{tpu_custom_call.1} parent=1 // pred_check_branch
      %26 = sbr.rel (0) target = $region9
    $region8: #{tpu_custom_call.1} parent=1 // pred_region
      %s28 = ssub.s32 128, 128
      %29 = vsyncadd [#allocation6], %s28
      %s31 = sshll.u32 [#allocation5], 4
      %s32 = int_to_ptr.vmem [resolvable:$true] %s31
      %34 = dma.hbm_to_vmem [thread:$0]  %s1, 128, %s32, [#allocation6]
    $region9: #{tpu_custom_call.1} parent=1 // pred_fallthru
      _
    // Predicated region
    $region10: #{tpu_custom_call.1} parent=1 // pred_check
      _
    $region11: #{tpu_custom_call.1} parent=1 // pred_check_branch
      %36 = sbr.rel (0) target = $region13
    $region12: #{tpu_custom_call.1} parent=1 // pred_region
      %s38 = ssub.s32 2048, 2048
      %39 = vsyncadd [#allocation6], %s38
      %s40 = sshll.u32 [#allocation7], 4
      %s41 = int_to_ptr.vmem [resolvable:$true] %s40
      %46 = dma.hbm_to_vmem [thread:$0]  %s2, 2048, %s41, [#allocation6], 128, 128, 8
    $region13: #{tpu_custom_call.1} parent=1 // pred_fallthru
      _
    // Predicated region
    $region14: #{tpu_custom_call.1} parent=1 // pred_check
      _
    $region15: #{tpu_custom_call.1} parent=1 // pred_check_branch
      %48 = sbr.rel (0) target = $region17
    $region16: #{tpu_custom_call.1} parent=1 // pred_region
      %s50 = ssub.s32 2048, 2048
      %51 = vsyncadd [#allocation9], %s50
      %s52 = sshll.u32 [#allocation8], 4
      %s53 = int_to_ptr.vmem [resolvable:$true] %s52
      %58 = dma.hbm_to_vmem [thread:$0]  %s3, 2048, %s53, [#allocation9], 128, 128, 8
    $region17: #{tpu_custom_call.1} parent=1 // pred_fallthru
      _
    // Predicated region
    $region18: #{tpu_custom_call.1} parent=1 // pred_check
      _
    $region19: #{tpu_custom_call.1} parent=1 // pred_check_branch
      %60 = sbr.rel (0) target = $region21
    $region20: #{tpu_custom_call.1} parent=1 // pred_region
      %s62 = ssub.s32 2048, 2048
      %63 = vsyncadd [#allocation9], %s62
      %s64 = sshll.u32 [#allocation10], 4
      %s65 = int_to_ptr.vmem [resolvable:$true] %s64
      %70 = dma.hbm_to_vmem [thread:$0]  %s4, 2048, %s65, [#allocation9], 128, 128, 8
    $region21: #{tpu_custom_call.1} parent=1 // pred_fallthru
      _
    // Predicated region
    $region22: #{tpu_custom_call.1} parent=1 // pred_check
      _
    $region23: #{tpu_custom_call.1} parent=1 // pred_check_branch
      %72 = sbr.rel (0) target = $region25
    $region24: #{tpu_custom_call.1} parent=1 // pred_region
      _
    $region25: #{tpu_custom_call.1} parent=1 // pred_fallthru
      _
    // Predicated region
    $region26: #{tpu_custom_call.1} parent=1 // pred_check
      _
    $region27: #{tpu_custom_call.1} parent=1 // pred_check_branch
      %74 = sbr.rel (0) target = $region29
    $region28: #{tpu_custom_call.1} parent=1 // pred_region
      %75 = dma.done [#allocation3], 128
    $region29: #{tpu_custom_call.1} parent=1 // pred_fallthru
      _
    // Predicated region
    $region30: #{tpu_custom_call.1} parent=1 // pred_check
      _
    $region31: #{tpu_custom_call.1} parent=1 // pred_check_branch
      %77 = sbr.rel (0) target = $region33
    $region32: #{tpu_custom_call.1} parent=1 // pred_region
      %78 = dma.done [#allocation6], 128
    $region33: #{tpu_custom_call.1} parent=1 // pred_fallthru
      _
    // Predicated region
    $region34: #{tpu_custom_call.1} parent=1 // pred_check
      _
    $region35: #{tpu_custom_call.1} parent=1 // pred_check_branch
      %80 = sbr.rel (0) target = $region37
    $region36: #{tpu_custom_call.1} parent=1 // pred_region
      %81 = dma.done [#allocation6], 2048
    $region37: #{tpu_custom_call.1} parent=1 // pred_fallthru
      _
    // Predicated region
    $region38: #{tpu_custom_call.1} parent=1 // pred_check
      _
    $region39: #{tpu_custom_call.1} parent=1 // pred_check_branch
      %83 = sbr.rel (0) target = $region41
    $region40: #{tpu_custom_call.1} parent=1 // pred_region
      %84 = dma.done [#allocation9], 2048
    $region41: #{tpu_custom_call.1} parent=1 // pred_fallthru
      _
    // Predicated region
    $region42: #{tpu_custom_call.1} parent=1 // pred_check
      _
    $region43: #{tpu_custom_call.1} parent=1 // pred_check_branch
      %86 = sbr.rel (0) target = $region45
    $region44: #{tpu_custom_call.1} parent=1 // pred_region
      %87 = dma.done [#allocation9], 2048
    $region45: #{tpu_custom_call.1} parent=1 // pred_fallthru
      _
    %v88 = vld [vmem:[%s5] sm:$0xf]
    %v89 = vld [vmem:[#allocation2] sm:$0xff]
    %v90 = vld [vmem:[#allocation5] sm:$0xff]
    %v91 = vlaneseq
    %v92 = vshrl.u32 %v91, 7
    %v93 = vsub.s32 0, %v92
    %v94 = vrot.slane %v88, %v93
    %vm95 = vcmask 64512
    %v97 = vsel %vm95, %v89, 0
    %99 = vmatprep.subr.mxu0 0.0
    %100 = vmatpush1.msra.mxu0 %v90
    %101 = vmatprep.subr.mxu0 0.0
    %102 = vmatpush1.msra.mxu0 0.0
    %103 = vmatprep.subr.mxu0 0.0
    %104 = vmatpush1.msra.mxu0 0.0
    %105 = vmatprep.subr.mxu0 0.0
    %106 = vmatpush1.msra.mxu0 0.0
    %107 = vmatprep.subr.mxu0 0.0
    %108 = vmatpush1.msra.mxu0 0.0
    %109 = vmatprep.subr.mxu0 0.0
    %110 = vmatpush1.msra.mxu0 0.0
    %111 = vmatprep.subr.mxu0 0.0
    %112 = vmatpush1.msra.mxu0 0.0
    %113 = vmatprep.subr.mxu0 0.0
    %114 = vmatpush1.msra.mxu0 0.0
    %115 = vmatprep.subr.mxu0 0.0
    %116 = vmatpush1.msra.mxu0 0.0
    %117 = vmatprep.subr.mxu0 0.0
    %118 = vmatpush1.msra.mxu0 0.0
    %119 = vmatprep.subr.mxu0 0.0
    %120 = vmatpush1.msra.mxu0 0.0
    %121 = vmatprep.subr.mxu0 0.0
    %122 = vmatpush1.msra.mxu0 0.0
    %123 = vmatprep.subr.mxu0 0.0
    %124 = vmatpush1.msra.mxu0 0.0
    %125 = vmatprep.subr.mxu0 0.0
    %126 = vmatpush1.msra.mxu0 0.0
    %127 = vmatprep.subr.mxu0 0.0
    %128 = vmatpush1.msra.mxu0 0.0
    %129 = vmatprep.subr.mxu0 0.0
    %130 = vmatpush1.msra.mxu0 0.0
    %131 = vmatprep.subr.mxu0 0.0
    %132 = vmatpush1.msra.mxu0 0.0
    %133 = vmatprep.subr.mxu0 0.0
    %134 = vmatpush1.msra.mxu0 0.0
    %135 = vmatprep.subr.mxu0 0.0
    %136 = vmatpush1.msra.mxu0 0.0
    %137 = vmatprep.subr.mxu0 0.0
    %138 = vmatpush1.msra.mxu0 0.0
    %139 = vmatprep.subr.mxu0 0.0
    %140 = vmatpush1.msra.mxu0 0.0
    %141 = vmatprep.subr.mxu0 0.0
    %142 = vmatpush1.msra.mxu0 0.0
    %143 = vmatprep.subr.mxu0 0.0
    %144 = vmatpush1.msra.mxu0 0.0
    %145 = vmatprep.subr.mxu0 0.0
    %146 = vmatpush1.msra.mxu0 0.0
    %147 = vmatprep.subr.mxu0 0.0
    %148 = vmatpush1.msra.mxu0 0.0
    %149 = vmatprep.subr.mxu0 0.0
    %150 = vmatpush1.msra.mxu0 0.0
    %151 = vmatprep.subr.mxu0 0.0
    %152 = vmatpush1.msra.mxu0 0.0
    %153 = vmatprep.subr.mxu0 0.0
    %154 = vmatpush1.msra.mxu0 0.0
    %155 = vmatprep.subr.mxu0 0.0
    %156 = vmatpush1.msra.mxu0 0.0
    %157 = vmatprep.subr.mxu0 0.0
    %158 = vmatpush1.msra.mxu0 0.0
    %159 = vmatprep.subr.mxu0 0.0
    %160 = vmatpush1.msra.mxu0 0.0
    %161 = vmatprep.subr.mxu0 0.0
    %162 = vmatpush1.msra.mxu0 0.0
    %163 = vmatprep.mubr.f32.mxu0 0.0
    %164 = vmatmul.mubr.f32.gmra.mrb[0].mxu0 %v97
    %v165 = vpop.f32.mrb[0].mxu0
    %v166 = vadd.f32 %v94, %v165
    %v167 = vpop.f32.mrb[0].mxu0
    %168 = vdwg.mxu0
    %v169 = vmax.f32 %v166, 0.0
    %v170 = vld [vmem:[#allocation7] sm:$0xff]
    %v171 = vld [vmem:[#allocation7 + $0x8] sm:$0xff]
    %v172 = vld [vmem:[#allocation7 + $0x10] sm:$0xff]
    %v173 = vld [vmem:[#allocation7 + $0x18] sm:$0xff]
    %v174 = vld [vmem:[#allocation7 + $0x20] sm:$0xff]
    %v175 = vld [vmem:[#allocation7 + $0x28] sm:$0xff]
    %v176 = vld [vmem:[#allocation7 + $0x30] sm:$0xff]
    %v177 = vld [vmem:[#allocation7 + $0x38] sm:$0xff]
    %v178 = vld [vmem:[#allocation7 + $0x40] sm:$0xff]
    %v179 = vld [vmem:[#allocation7 + $0x48] sm:$0xff]
    %v180 = vld [vmem:[#allocation7 + $0x50] sm:$0xff]
    %v181 = vld [vmem:[#allocation7 + $0x58] sm:$0xff]
    %v182 = vld [vmem:[#allocation7 + $0x60] sm:$0xff]
    %v183 = vld [vmem:[#allocation7 + $0x68] sm:$0xff]
    %v184 = vld [vmem:[#allocation7 + $0x70] sm:$0xff]
    %v185 = vld [vmem:[#allocation7 + $0x78] sm:$0xff]
    %v186 = vlaneseq
    %v187 = vshrl.u32 %v186, 7
    %v188 = vsub.s32 1, %v187
    %v189 = vrot.slane %v88, %v188
    %190 = vmatprep.subr.mxu0 0.0
    %191 = vmatpush1.msra.mxu0 %v170
    %192 = vmatprep.subr.mxu0 0.0
    %193 = vmatpush1.msra.mxu0 %v171
    %194 = vmatprep.subr.mxu0 0.0
    %195 = vmatpush1.msra.mxu0 %v172
    %196 = vmatprep.subr.mxu0 0.0
    %197 = vmatpush1.msra.mxu0 %v173
    %198 = vmatprep.subr.mxu0 0.0
    %199 = vmatpush1.msra.mxu0 %v174
    %200 = vmatprep.subr.mxu0 0.0
    %201 = vmatpush1.msra.mxu0 %v175
    %202 = vmatprep.subr.mxu0 0.0
    %203 = vmatpush1.msra.mxu0 %v176
    %204 = vmatprep.subr.mxu0 0.0
    %205 = vmatpush1.msra.mxu0 %v177
    %206 = vmatprep.subr.mxu0 0.0
    %207 = vmatpush1.msra.mxu0 %v178
    %208 = vmatprep.subr.mxu0 0.0
    %209 = vmatpush1.msra.mxu0 %v179
    %210 = vmatprep.subr.mxu0 0.0
    %211 = vmatpush1.msra.mxu0 %v180
    %212 = vmatprep.subr.mxu0 0.0
    %213 = vmatpush1.msra.mxu0 %v181
    %214 = vmatprep.subr.mxu0 0.0
    %215 = vmatpush1.msra.mxu0 %v182
    %216 = vmatprep.subr.mxu0 0.0
    %217 = vmatpush1.msra.mxu0 %v183
    %218 = vmatprep.subr.mxu0 0.0
    %219 = vmatpush1.msra.mxu0 %v184
    %220 = vmatprep.subr.mxu0 0.0
    %221 = vmatpush1.msra.mxu0 %v185
    %222 = vmatprep.subr.mxu0 0.0
    %223 = vmatpush1.msra.mxu0 0.0
    %224 = vmatprep.subr.mxu0 0.0
    %225 = vmatpush1.msra.mxu0 0.0
    %226 = vmatprep.subr.mxu0 0.0
    %227 = vmatpush1.msra.mxu0 0.0
    %228 = vmatprep.subr.mxu0 0.0
    %229 = vmatpush1.msra.mxu0 0.0
    %230 = vmatprep.subr.mxu0 0.0
    %231 = vmatpush1.msra.mxu0 0.0
    %232 = vmatprep.subr.mxu0 0.0
    %233 = vmatpush1.msra.mxu0 0.0
    %234 = vmatprep.subr.mxu0 0.0
    %235 = vmatpush1.msra.mxu0 0.0
    %236 = vmatprep.subr.mxu0 0.0
    %237 = vmatpush1.msra.mxu0 0.0
    %238 = vmatprep.subr.mxu0 0.0
    %239 = vmatpush1.msra.mxu0 0.0
    %240 = vmatprep.subr.mxu0 0.0
    %241 = vmatpush1.msra.mxu0 0.0
    %242 = vmatprep.subr.mxu0 0.0
    %243 = vmatpush1.msra.mxu0 0.0
    %244 = vmatprep.subr.mxu0 0.0
    %245 = vmatpush1.msra.mxu0 0.0
    %246 = vmatprep.subr.mxu0 0.0
    %247 = vmatpush1.msra.mxu0 0.0
    %248 = vmatprep.subr.mxu0 0.0
    %249 = vmatpush1.msra.mxu0 0.0
    %250 = vmatprep.subr.mxu0 0.0
    %251 = vmatpush1.msra.mxu0 0.0
    %252 = vmatprep.subr.mxu0 0.0
    %253 = vmatpush1.msra.mxu0 0.0
    %254 = vmatprep.mubr.f32.mxu0 0.0
    %255 = vmatmul.mubr.f32.gmra.mrb[0].mxu0 %v169
    %v256 = vpop.f32.mrb[0].mxu0
    %v257 = vadd.f32 %v189, %v256
    %v258 = vpop.f32.mrb[0].mxu0
    %259 = vdwg.mxu0
    %v260 = vmax.f32 %v257, 0.0
    %v261 = vld [vmem:[#allocation8] sm:$0xff]
    %v262 = vld [vmem:[#allocation8 + $0x8] sm:$0xff]
    %v263 = vld [vmem:[#allocation8 + $0x10] sm:$0xff]
    %v264 = vld [vmem:[#allocation8 + $0x18] sm:$0xff]
    %v265 = vld [vmem:[#allocation8 + $0x20] sm:$0xff]
    %v266 = vld [vmem:[#allocation8 + $0x28] sm:$0xff]
    %v267 = vld [vmem:[#allocation8 + $0x30] sm:$0xff]
    %v268 = vld [vmem:[#allocation8 + $0x38] sm:$0xff]
    %v269 = vld [vmem:[#allocation8 + $0x40] sm:$0xff]
    %v270 = vld [vmem:[#allocation8 + $0x48] sm:$0xff]
    %v271 = vld [vmem:[#allocation8 + $0x50] sm:$0xff]
    %v272 = vld [vmem:[#allocation8 + $0x58] sm:$0xff]
    %v273 = vld [vmem:[#allocation8 + $0x60] sm:$0xff]
    %v274 = vld [vmem:[#allocation8 + $0x68] sm:$0xff]
    %v275 = vld [vmem:[#allocation8 + $0x70] sm:$0xff]
    %v276 = vld [vmem:[#allocation8 + $0x78] sm:$0xff]
    %v277 = vlaneseq
    %v278 = vshrl.u32 %v277, 7
    %v279 = vsub.s32 2, %v278
    %v280 = vrot.slane %v88, %v279
    %281 = vmatprep.subr.mxu0 0.0
    %282 = vmatpush1.msra.mxu0 %v261
    %283 = vmatprep.subr.mxu0 0.0
    %284 = vmatpush1.msra.mxu0 %v262
    %285 = vmatprep.subr.mxu0 0.0
    %286 = vmatpush1.msra.mxu0 %v263
    %287 = vmatprep.subr.mxu0 0.0
    %288 = vmatpush1.msra.mxu0 %v264
    %289 = vmatprep.subr.mxu0 0.0
    %290 = vmatpush1.msra.mxu0 %v265
    %291 = vmatprep.subr.mxu0 0.0
    %292 = vmatpush1.msra.mxu0 %v266
    %293 = vmatprep.subr.mxu0 0.0
    %294 = vmatpush1.msra.mxu0 %v267
    %295 = vmatprep.subr.mxu0 0.0
    %296 = vmatpush1.msra.mxu0 %v268
    %297 = vmatprep.subr.mxu0 0.0
    %298 = vmatpush1.msra.mxu0 %v269
    %299 = vmatprep.subr.mxu0 0.0
    %300 = vmatpush1.msra.mxu0 %v270
    %301 = vmatprep.subr.mxu0 0.0
    %302 = vmatpush1.msra.mxu0 %v271
    %303 = vmatprep.subr.mxu0 0.0
    %304 = vmatpush1.msra.mxu0 %v272
    %305 = vmatprep.subr.mxu0 0.0
    %306 = vmatpush1.msra.mxu0 %v273
    %307 = vmatprep.subr.mxu0 0.0
    %308 = vmatpush1.msra.mxu0 %v274
    %309 = vmatprep.subr.mxu0 0.0
    %310 = vmatpush1.msra.mxu0 %v275
    %311 = vmatprep.subr.mxu0 0.0
    %312 = vmatpush1.msra.mxu0 %v276
    %313 = vmatprep.subr.mxu0 0.0
    %314 = vmatpush1.msra.mxu0 0.0
    %315 = vmatprep.subr.mxu0 0.0
    %316 = vmatpush1.msra.mxu0 0.0
    %317 = vmatprep.subr.mxu0 0.0
    %318 = vmatpush1.msra.mxu0 0.0
    %319 = vmatprep.subr.mxu0 0.0
    %320 = vmatpush1.msra.mxu0 0.0
    %321 = vmatprep.subr.mxu0 0.0
    %322 = vmatpush1.msra.mxu0 0.0
    %323 = vmatprep.subr.mxu0 0.0
    %324 = vmatpush1.msra.mxu0 0.0
    %325 = vmatprep.subr.mxu0 0.0
    %326 = vmatpush1.msra.mxu0 0.0
    %327 = vmatprep.subr.mxu0 0.0
    %328 = vmatpush1.msra.mxu0 0.0
    %329 = vmatprep.subr.mxu0 0.0
    %330 = vmatpush1.msra.mxu0 0.0
    %331 = vmatprep.subr.mxu0 0.0
    %332 = vmatpush1.msra.mxu0 0.0
    %333 = vmatprep.subr.mxu0 0.0
    %334 = vmatpush1.msra.mxu0 0.0
    %335 = vmatprep.subr.mxu0 0.0
    %336 = vmatpush1.msra.mxu0 0.0
    %337 = vmatprep.subr.mxu0 0.0
    %338 = vmatpush1.msra.mxu0 0.0
    %339 = vmatprep.subr.mxu0 0.0
    %340 = vmatpush1.msra.mxu0 0.0
    %341 = vmatprep.subr.mxu0 0.0
    %342 = vmatpush1.msra.mxu0 0.0
    %343 = vmatprep.subr.mxu0 0.0
    %344 = vmatpush1.msra.mxu0 0.0
    %345 = vmatprep.mubr.f32.mxu0 0.0
    %346 = vmatmul.mubr.f32.gmra.mrb[0].mxu0 %v260
    %v347 = vpop.f32.mrb[0].mxu0
    %v348 = vadd.f32 %v280, %v347
    %v349 = vpop.f32.mrb[0].mxu0
    %350 = vdwg.mxu0
    %v351 = vmax.f32 %v348, 0.0
    %v352 = vld [vmem:[#allocation10] sm:$0xff]
    %v353 = vld [vmem:[#allocation10 + $0x8] sm:$0xff]
    %v354 = vld [vmem:[#allocation10 + $0x10] sm:$0xff]
    %v355 = vld [vmem:[#allocation10 + $0x18] sm:$0xff]
    %v356 = vld [vmem:[#allocation10 + $0x20] sm:$0xff]
    %v357 = vld [vmem:[#allocation10 + $0x28] sm:$0xff]
    %v358 = vld [vmem:[#allocation10 + $0x30] sm:$0xff]
    %v359 = vld [vmem:[#allocation10 + $0x38] sm:$0xff]
    %v360 = vld [vmem:[#allocation10 + $0x40] sm:$0xff]
    %v361 = vld [vmem:[#allocation10 + $0x48] sm:$0xff]
    %v362 = vld [vmem:[#allocation10 + $0x50] sm:$0xff]
    %v363 = vld [vmem:[#allocation10 + $0x58] sm:$0xff]
    %v364 = vld [vmem:[#allocation10 + $0x60] sm:$0xff]
    %v365 = vld [vmem:[#allocation10 + $0x68] sm:$0xff]
    %v366 = vld [vmem:[#allocation10 + $0x70] sm:$0xff]
    %v367 = vld [vmem:[#allocation10 + $0x78] sm:$0xff]
    %v368 = vlaneseq
    %v369 = vshrl.u32 %v368, 7
    %v370 = vsub.s32 3, %v369
    %v371 = vrot.slane %v88, %v370
    %372 = vmatprep.subr.mxu0 0.0
    %373 = vmatpush1.msra.mxu0 %v352
    %374 = vmatprep.subr.mxu0 0.0
    %375 = vmatpush1.msra.mxu0 %v353
    %376 = vmatprep.subr.mxu0 0.0
    %377 = vmatpush1.msra.mxu0 %v354
    %378 = vmatprep.subr.mxu0 0.0
    %379 = vmatpush1.msra.mxu0 %v355
    %380 = vmatprep.subr.mxu0 0.0
    %381 = vmatpush1.msra.mxu0 %v356
    %382 = vmatprep.subr.mxu0 0.0
    %383 = vmatpush1.msra.mxu0 %v357
    %384 = vmatprep.subr.mxu0 0.0
    %385 = vmatpush1.msra.mxu0 %v358
    %386 = vmatprep.subr.mxu0 0.0
    %387 = vmatpush1.msra.mxu0 %v359
    %388 = vmatprep.subr.mxu0 0.0
    %389 = vmatpush1.msra.mxu0 %v360
    %390 = vmatprep.subr.mxu0 0.0
    %391 = vmatpush1.msra.mxu0 %v361
    %392 = vmatprep.subr.mxu0 0.0
    %393 = vmatpush1.msra.mxu0 %v362
    %394 = vmatprep.subr.mxu0 0.0
    %395 = vmatpush1.msra.mxu0 %v363
    %396 = vmatprep.subr.mxu0 0.0
    %397 = vmatpush1.msra.mxu0 %v364
    %398 = vmatprep.subr.mxu0 0.0
    %399 = vmatpush1.msra.mxu0 %v365
    %400 = vmatprep.subr.mxu0 0.0
    %401 = vmatpush1.msra.mxu0 %v366
    %402 = vmatprep.subr.mxu0 0.0
    %403 = vmatpush1.msra.mxu0 %v367
    %404 = vmatprep.subr.mxu0 0.0
    %405 = vmatpush1.msra.mxu0 0.0
    %406 = vmatprep.subr.mxu0 0.0
    %407 = vmatpush1.msra.mxu0 0.0
    %408 = vmatprep.subr.mxu0 0.0
    %409 = vmatpush1.msra.mxu0 0.0
    %410 = vmatprep.subr.mxu0 0.0
    %411 = vmatpush1.msra.mxu0 0.0
    %412 = vmatprep.subr.mxu0 0.0
    %413 = vmatpush1.msra.mxu0 0.0
    %414 = vmatprep.subr.mxu0 0.0
    %415 = vmatpush1.msra.mxu0 0.0
    %416 = vmatprep.subr.mxu0 0.0
    %417 = vmatpush1.msra.mxu0 0.0
    %418 = vmatprep.subr.mxu0 0.0
    %419 = vmatpush1.msra.mxu0 0.0
    %420 = vmatprep.subr.mxu0 0.0
    %421 = vmatpush1.msra.mxu0 0.0
    %422 = vmatprep.subr.mxu0 0.0
    %423 = vmatpush1.msra.mxu0 0.0
    %424 = vmatprep.subr.mxu0 0.0
    %425 = vmatpush1.msra.mxu0 0.0
    %426 = vmatprep.subr.mxu0 0.0
    %427 = vmatpush1.msra.mxu0 0.0
    %428 = vmatprep.subr.mxu0 0.0
    %429 = vmatpush1.msra.mxu0 0.0
    %430 = vmatprep.subr.mxu0 0.0
    %431 = vmatpush1.msra.mxu0 0.0
    %432 = vmatprep.subr.mxu0 0.0
    %433 = vmatpush1.msra.mxu0 0.0
    %434 = vmatprep.subr.mxu0 0.0
    %435 = vmatpush1.msra.mxu0 0.0
    %436 = vmatprep.mubr.f32.mxu0 0.0
    %437 = vmatmul.mubr.f32.gmra.mrb[0].mxu0 %v351
    %v438 = vpop.f32.mrb[0].mxu0
    %v439 = vadd.f32 %v371, %v438
    %v440 = vpop.f32.mrb[0].mxu0
    %441 = vdwg.mxu0
    %v442 = vmax.f32 %v439, 0.0
    %443 = vst [vmem:[#allocation11] sm:$0xff] %v442
    // Predicated region
    $region46: #{tpu_custom_call.1} parent=1 // pred_check
      _
    $region47: #{tpu_custom_call.1} parent=1 // pred_check_branch
      %445 = sbr.rel (0) target = $region49
    $region48: #{tpu_custom_call.1} parent=1 // pred_region
      %s447 = ssub.s32 128, 128
      %448 = vsyncadd [#allocation4], %s447
      %s450 = sshll.u32 [#allocation11], 4
      %s451 = int_to_ptr.vmem [resolvable:$true] %s450
      %453 = dma.vmem_to_hbm [thread:$0]  %s451, 128, %s6, [#allocation4]
    $region49: #{tpu_custom_call.1} parent=1 // pred_fallthru
      _
    // Predicated region
    $region50: #{tpu_custom_call.1} parent=1 // pred_check
      _
    $region51: #{tpu_custom_call.1} parent=1 // pred_check_branch
      %455 = sbr.rel (0) target = $region53
    $region52: #{tpu_custom_call.1} parent=1 // pred_region
      %456 = dma.done [#allocation4], 128
    $region53: #{tpu_custom_call.1} parent=1 // pred_fallthru
      _
    %457 = vsyncpa [#allocation3], 1
    %458 = vsyncpa [#allocation6], 1
    %459 = vsyncpa [#allocation9], 1
    %460 = vsyncpa [#allocation4], 1

</llo_original>
